<compile_context>
chip_gen: v5e
topology: v5e:2x2
jax: 0.10.0
libtpu: 0.0.40
codegen_flags: <defaults>
</compile_context>

<pallas_src>
import math

import jax
import jax.numpy as jnp
from jax import lax
from jax.experimental import pallas as pl
from jax.experimental.pallas import tpu as pltpu

_EPS = 1e-5


# ---------------------------------------------------------------------------
# Kernel A: per-image partial statistics (sum, sumsq) of conv1(x).
# grid = (N,), "parallel".  conv1 is recomputed in kernel B (cheaper than a
# full HBM write + read of the pre-BN activation).
# ---------------------------------------------------------------------------
def _conv1_stats_kernel(x_ref, w1_ref, st_ref):
    # x_ref: (H*W, Cin) bf16 ; w1_ref: (Cin, Cmid) bf16 ; st_ref: (2, Cmid) f32
    s1 = jnp.dot(x_ref[...], w1_ref[...], preferred_element_type=jnp.float32)
    st_ref[0:1, :] = jnp.sum(s1, axis=0, keepdims=True)
    st_ref[1:2, :] = jnp.sum(s1 * s1, axis=0, keepdims=True)


# ---------------------------------------------------------------------------
# Kernel B: fused  conv1 -> BN1(folded scale/shift) -> attention fuse ->
#           3x3 conv (raw, pre-BN2)  +  per-image BN2 partial stats.
# grid = (N,), "parallel".
# ---------------------------------------------------------------------------
def _make_stage_kernel(h, w, c_mid, fuse):
    hw = h * w

    def kernel(*refs):
        if fuse:
            (x_ref, y_ref, w1_ref, bn1_ref, wa_ref, ba_ref, w2_ref,
             xf_ref, s2_ref, st2_ref, xpad_ref) = refs
        else:
            (x_ref, w1_ref, bn1_ref, w2_ref,
             xf_ref, s2_ref, st2_ref, xpad_ref) = refs

        # ---- conv1 (1x1) on the MXU + folded BN1 affine ---------------------
        s1 = jnp.dot(x_ref[...], w1_ref[...],
                     preferred_element_type=jnp.float32)           # (HW, Cmid)
        x1 = s1 * bn1_ref[0:1, :] + bn1_ref[1:2, :]

        # ---- attention fusion: width-2 logits on VPU/XLU (not the MXU) ------
        if fuse:
            yv = y_ref[...].astype(jnp.float32)                    # (HW, Cmid)
            z0 = (jnp.sum(x1 * wa_ref[0:1, :], axis=-1, keepdims=True)
                  + jnp.sum(yv * wa_ref[1:2, :], axis=-1, keepdims=True)
                  + ba_ref[0:1, 0:1])
            z1 = (jnp.sum(x1 * wa_ref[2:3, :], axis=-1, keepdims=True)
                  + jnp.sum(yv * wa_ref[3:4, :], axis=-1, keepdims=True)
                  + ba_ref[0:1, 1:2])
            xf = x1 * jax.nn.sigmoid(z0) + yv * jax.nn.sigmoid(z1)
        else:
            xf = x1
        xf_ref[...] = xf                                           # module output

        # ---- 3x3 "same" conv: zero-padded plane in VMEM scratch (bf16), -----
        # ---- 9 shifted matmuls accumulated into the VMEM-resident output ----
        xpad_ref[...] = jnp.zeros_like(xpad_ref)
        xpad_ref[1:h + 1, 1:w + 1, :] = xf.reshape(h, w, c_mid).astype(jnp.bfloat16)

        s2_ref[...] = jnp.zeros_like(s2_ref)
        for k in range(9):                            # statically unrolled taps
            ky, kx = divmod(k, 3)
            patch = xpad_ref[ky:ky + h, kx:kx + w, :].reshape(hw, c_mid)
            s2_ref[...] += jnp.dot(patch, w2_ref[k],
                                   preferred_element_type=jnp.float32)

        # ---- per-image partial BN2 statistics --------------------------------
        s2 = s2_ref[...]
        st2_ref[0:1, :] = jnp.sum(s2, axis=0, keepdims=True)
        st2_ref[1:2, :] = jnp.sum(s2 * s2, axis=0, keepdims=True)

    return kernel


# ---------------------------------------------------------------------------
# Kernel C: apply BN2 scale/shift — tiled elementwise pass over the raw conv2.
# ---------------------------------------------------------------------------
def _bn_apply_kernel(s_ref, bn_ref, o_ref):
    o_ref[...] = s_ref[...] * bn_ref[0:1, :] + bn_ref[1:2, :]


class ABF:
    """JAX/Pallas port of the PyTorch ABF module (deterministic synthetic weights)."""

    def __init__(self, in_channel, mid_channel, out_channel, fuse, key):
        k1, k2, k3, k4 = jax.random.split(key, 4)
        # conv1: kaiming_uniform_(a=1) -> bound = sqrt(3 / fan_in), fan_in = in*1*1
        bnd1 = math.sqrt(3.0 / in_channel)
        w1 = jax.random.uniform(k1, (in_channel, mid_channel), jnp.float32, -bnd1, bnd1)
        # conv2: kaiming_uniform_(a=1) -> fan_in = mid*3*3
        bnd2 = math.sqrt(3.0 / (mid_channel * 9))
        w2 = jax.random.uniform(k2, (9, mid_channel, out_channel), jnp.float32, -bnd2, bnd2)
        # bf16 weights for the MXU (f32 accumulation inside the kernels).
        self.w1 = w1.astype(jnp.bfloat16)
        self.w2 = w2.astype(jnp.bfloat16)
        # BatchNorm params (fresh module defaults: gamma=1, beta=0)
        self.g1 = jnp.ones((mid_channel,), jnp.float32)
        self.b1 = jnp.zeros((mid_channel,), jnp.float32)
        self.g2 = jnp.ones((out_channel,), jnp.float32)
        self.b2 = jnp.zeros((out_channel,), jnp.float32)
        self.fuse = fuse
        if fuse:
            fan_in = 2 * mid_channel              # att_conv: default Conv2d init
            bnda = 1.0 / math.sqrt(fan_in)
            watt = jax.random.uniform(k3, (2 * mid_channel, 2), jnp.float32, -bnda, bnda)
            # rows: [x->z0, y->z0, x->z1, y->z1]  (VPU weighted-sum layout)
            self.watt_vpu = jnp.stack(
                [watt[:mid_channel, 0], watt[mid_channel:, 0],
                 watt[:mid_channel, 1], watt[mid_channel:, 1]], axis=0)
            self.batt = jax.random.uniform(k4, (1, 2), jnp.float32, -bnda, bnda)
        self.in_c, self.mid_c, self.out_c = in_channel, mid_channel, out_channel

    def __call__(self, x, y=None):
        # x: (N, in_c, H, W) NCHW ; y (if fuse): (N, mid_c, Hy, Wy) NCHW
        n, _, h, w = x.shape
        hw = h * w
        p = n * hw
        cin, cmid, cout = self.in_c, self.mid_c, self.out_c

        # NCHW -> NHWC -> (N, H*W, C), bf16 activations (boundary glue).
        x_flat = jnp.transpose(x, (0, 2, 3, 1)).reshape(n, hw, cin).astype(jnp.bfloat16)

        cparams = pltpu.CompilerParams(dimension_semantics=("parallel",),
                                       vmem_limit_bytes=32 * 1024 * 1024)

        # ------------------ pass 1: BN1 batch statistics ---------------------
        st1 = pl.pallas_call(
            _conv1_stats_kernel,
            grid=(n,),
            in_specs=[pl.BlockSpec((None, hw, cin), lambda i: (i, 0, 0)),
                      pl.BlockSpec((cin, cmid), lambda i: (0, 0))],
            out_specs=pl.BlockSpec((None, 2, cmid), lambda i: (i, 0, 0)),
            out_shape=jax.ShapeDtypeStruct((n, 2, cmid), jnp.float32),
            compiler_params=cparams,
        )(x_flat, self.w1)
        st1 = jnp.sum(st1, axis=0)                              # (2, Cmid)
        mu1 = st1[0] / p
        var1 = jnp.maximum(st1[1] / p - mu1 * mu1, 0.0)         # biased var, guarded
        scale1 = self.g1 * lax.rsqrt(var1 + _EPS)
        shift1 = self.b1 - mu1 * scale1
        bn1 = jnp.stack([scale1, shift1], axis=0)               # (2, Cmid) f32

        # ------- pass 2: fused conv1+BN1 (+attention) + 3x3 conv (raw) -------
        kern = _make_stage_kernel(h, w, cmid, self.fuse)
        out_shapes = (jax.ShapeDtypeStruct((n, hw, cmid), jnp.float32),   # xf
                      jax.ShapeDtypeStruct((n, hw, cout), jnp.float32),   # raw conv2
                      jax.ShapeDtypeStruct((n, 2, cout), jnp.float32))    # BN2 stats
        out_specs = (pl.BlockSpec((None, hw, cmid), lambda i: (i, 0, 0)),
                     pl.BlockSpec((None, hw, cout), lambda i: (i, 0, 0)),
                     pl.BlockSpec((None, 2, cout), lambda i: (i, 0, 0)))
        scratch = [pltpu.VMEM((h + 2, w + 2, cmid), jnp.bfloat16)]

        if self.fuse:
            # nearest interpolation, PyTorch semantics: src = floor(dst*in/out).
            # TODO(synk): fold the NN-upsample gather into the kernel index_map
            #             instead of materializing y_up in HBM.
            _, _, yh, yw = y.shape
            ri = (jnp.arange(h) * yh) // h
            ci = (jnp.arange(w) * yw) // w
            y_nhwc = jnp.transpose(y, (0, 2, 3, 1))
            y_flat = y_nhwc[:, ri][:, :, ci].reshape(n, hw, cmid).astype(jnp.bfloat16)
            in_specs = [pl.BlockSpec((None, hw, cin), lambda i: (i, 0, 0)),
                        pl.BlockSpec((None, hw, cmid), lambda i: (i, 0, 0)),
                        pl.BlockSpec((cin, cmid), lambda i: (0, 0)),
                        pl.BlockSpec((2, cmid), lambda i: (0, 0)),
                        pl.BlockSpec((4, cmid), lambda i: (0, 0)),
                        pl.BlockSpec((1, 2), lambda i: (0, 0)),
                        pl.BlockSpec((9, cmid, cout), lambda i: (0, 0, 0))]
            args = (x_flat, y_flat, self.w1, bn1, self.watt_vpu, self.batt, self.w2)
        else:
            in_specs = [pl.BlockSpec((None, hw, cin), lambda i: (i, 0, 0)),
                        pl.BlockSpec((cin, cmid), lambda i: (0, 0)),
                        pl.BlockSpec((2, cmid), lambda i: (0, 0)),
                        pl.BlockSpec((9, cmid, cout), lambda i: (0, 0, 0))]
            args = (x_flat, self.w1, bn1, self.w2)

        xf, s2_raw, st2 = pl.pallas_call(
            kern,
            grid=(n,),
            in_specs=in_specs,
            out_specs=out_specs,
            out_shape=out_shapes,
            scratch_shapes=scratch,
            compiler_params=cparams,
        )(*args)

        # ------------------ pass 3: finalize + apply BN2 ---------------------
        st2 = jnp.sum(st2, axis=0)                              # (2, Cout)
        mu2 = st2[0] / p
        var2 = jnp.maximum(st2[1] / p - mu2 * mu2, 0.0)
        scale2 = self.g2 * lax.rsqrt(var2 + _EPS)
        shift2 = self.b2 - mu2 * scale2
        bn2 = jnp.stack([scale2, shift2], axis=0)               # (2, Cout)

        out = pl.pallas_call(
            _bn_apply_kernel,
            grid=(n,),
            in_specs=[pl.BlockSpec((None, hw, cout), lambda i: (i, 0, 0)),
                      pl.BlockSpec((2, cout), lambda i: (0, 0))],
            out_specs=pl.BlockSpec((None, hw, cout), lambda i: (i, 0, 0)),
            out_shape=jax.ShapeDtypeStruct((n, hw, cout), jnp.float32),
            compiler_params=cparams,
        )(s2_raw, bn2)

        # back to PyTorch NCHW layout (boundary glue only).
        y_out = jnp.transpose(out.reshape(n, h, w, cout), (0, 3, 1, 2))
        x_out = jnp.transpose(xf.reshape(n, h, w, cmid), (0, 3, 1, 2))
        return y_out, x_out


if __name__ == "__main__":
    key = jax.random.PRNGKey(0)
    kp, kx, kyy, kp2, kx2 = jax.random.split(key, 5)

    in_c, mid_c, out_c = 4, 8, 16
    n, h, w = 2, 16, 16

    # fuse=True path
    abf = ABF(in_c, mid_c, out_c, fuse=True, key=kp)
    x = jax.random.normal(kx, (n, in_c, h, w), jnp.float32)               # NCHW
    y = jax.random.normal(kyy, (n, mid_c, h // 2, w // 2), jnp.float32)   # NCHW
    y_out, x_out = abf(x, y)
    jax.block_until_ready((y_out, x_out))
    assert y_out.shape == (n, out_c, h, w), y_out.shape
    assert x_out.shape == (n, mid_c, h, w), x_out.shape
    assert bool(jnp.all(jnp.isfinite(y_out))) and bool(jnp.all(jnp.isfinite(x_out)))

    # fuse=False path
    abf2 = ABF(mid_c, mid_c, out_c, fuse=False, key=kp2)
    x2 = jax.random.normal(kx2, (n, mid_c, h, w), jnp.float32)
    y_out2, x_out2 = abf2(x2)
    jax.block_until_ready((y_out2, x_out2))
    assert y_out2.shape == (n, out_c, h, w), y_out2.shape
    assert x_out2.shape == (n, mid_c, h, w), x_out2.shape

    print("KERNEL_OK")
</pallas_src>

<mosaic_0001>
module attributes {stable_mosaic.version = 11 : i64} {
  func.func @_conv1_stats_kernel(%arg0: i32, %arg1: memref<1x256x4xbf16, #tpu.memory_space<vmem>>, %arg2: memref<4x8xbf16, #tpu.memory_space<vmem>>, %arg3: memref<1x2x8xf32, #tpu.memory_space<vmem>>) attributes {dimension_semantics = [#tpu.dimension_semantics<parallel>], iteration_bounds = array<i64: 2>, scalar_prefetch = 0 : i64, scratch_operands = 0 : i64, tpu.core_type = #tpu.core_type<tc>, window_params = [{transform_indices = @transform_0, window_bounds = array<i64: 1, 256, 4>}, {pipeline_mode = #tpu.pipeline_mode<synchronous>, transform_indices = @transform_1, window_bounds = array<i64: 4, 8>}, {transform_indices = @transform_2, window_bounds = array<i64: 1, 2, 8>}]} {
    %c0 = arith.constant 0 : index
    %c0_0 = arith.constant 0 : index
    %c0_1 = arith.constant 0 : index
    %0 = vector.load %arg1[%c0, %c0_0, %c0_1] : memref<1x256x4xbf16, #tpu.memory_space<vmem>>, vector<1x256x4xbf16>
    %1 = vector.shape_cast %0 : vector<1x256x4xbf16> to vector<256x4xbf16>
    %c0_2 = arith.constant 0 : index
    %c0_3 = arith.constant 0 : index
    %2 = vector.load %arg2[%c0_2, %c0_3] : memref<4x8xbf16, #tpu.memory_space<vmem>>, vector<4x8xbf16>
    %cst = arith.constant dense<0.000000e+00> : vector<256x8xf32>
    %3 = tpu.matmul %1, %2, %cst {dimension_numbers = #tpu.dot_dimension_numbers<[1], [0], [0], [1], [0, 0, 1, 1], [], []>} : vector<256x4xbf16>, vector<4x8xbf16>, vector<256x8xf32> -> vector<256x8xf32>
    %cst_4 = arith.constant dense<0.000000e+00> : vector<8xf32>
    %4 = vector.multi_reduction <add>, %3, %cst_4 [0] : vector<256x8xf32> to vector<8xf32>
    %5 = vector.shape_cast %4 : vector<8xf32> to vector<1x8xf32>
    %c0_5 = arith.constant 0 : index
    %c0_6 = arith.constant 0 : index
    %c0_7 = arith.constant 0 : index
    %6 = vector.load %arg3[%c0_5, %c0_6, %c0_7] : memref<1x2x8xf32, #tpu.memory_space<vmem>>, vector<1x1x8xf32>
    %7 = vector.shape_cast %6 : vector<1x1x8xf32> to vector<1x8xf32>
    %8 = vector.shape_cast %5 : vector<1x8xf32> to vector<1x1x8xf32>
    tpu.vector_store %arg3[%c0_5, %c0_6, %c0_7], %8 {strides = array<i32>} : memref<1x2x8xf32, #tpu.memory_space<vmem>>, vector<1x1x8xf32>,
    %9 = arith.mulf %3, %3 : vector<256x8xf32>
    %cst_8 = arith.constant dense<0.000000e+00> : vector<8xf32>
    %10 = vector.multi_reduction <add>, %9, %cst_8 [0] : vector<256x8xf32> to vector<8xf32>
    %11 = vector.shape_cast %10 : vector<8xf32> to vector<1x8xf32>
    %c0_9 = arith.constant 0 : index
    %c1 = arith.constant 1 : index
    %c0_10 = arith.constant 0 : index
    %12 = vector.load %arg3[%c0_9, %c1, %c0_10] : memref<1x2x8xf32, #tpu.memory_space<vmem>>, vector<1x1x8xf32>
    %13 = vector.shape_cast %12 : vector<1x1x8xf32> to vector<1x8xf32>
    %14 = vector.shape_cast %11 : vector<1x8xf32> to vector<1x1x8xf32>
    tpu.vector_store %arg3[%c0_9, %c1, %c0_10], %14 {strides = array<i32>} : memref<1x2x8xf32, #tpu.memory_space<vmem>>, vector<1x1x8xf32>,
    return
  }
  func.func @transform_0(%arg0: i32) -> (i32, i32, i32) {
    %c0_i32 = arith.constant 0 : i32
    %c0_i32_0 = arith.constant 0 : i32
    %c0_i32_1 = arith.constant 0 : i32
    return %arg0, %c0_i32, %c0_i32_0 : i32, i32, i32
  }
  func.func @transform_1(%arg0: i32) -> (i32, i32) {
    %c0_i32 = arith.constant 0 : i32
    %c0_i32_0 = arith.constant 0 : i32
    %c0_i32_1 = arith.constant 0 : i32
    return %c0_i32, %c0_i32_0 : i32, i32
  }
  func.func @transform_2(%arg0: i32) -> (i32, i32, i32) {
    %c0_i32 = arith.constant 0 : i32
    %c0_i32_0 = arith.constant 0 : i32
    %c0_i32_1 = arith.constant 0 : i32
    return %arg0, %c0_i32, %c0_i32_0 : i32, i32, i32
  }
}

</mosaic_0001>

<llo_original>
// kernel: tpu_custom_call.1
$region0: #{tpu_custom_call.1}
  #allocation0 [shape = 'u32[]', space=smem, size = 0x4, offset = 0x4, fixed_abs, tag = 'smem constant byte address 0x4 - core index']
  #allocation1 [shape = 'u32[72,128]{1,0:T(1,128)}', space=vmem, size = 0x9000, scoped, tag = 'internal scratch']
  %s0 = inlined_call_operand.vmem [shape: bf16[2,256,4], index: 0, kind: input, shape index: {}]
  %s1 = inlined_call_operand.vmem [shape: bf16[4,8], index: 1, kind: input, shape index: {}]
  %s2 = inlined_call_operand.hbm [shape: f32[2,2,8], index: 2, kind: output, shape index: {}]
  %s3 = sld [smem:[#allocation0]]
  $region41: #{tpu_custom_call.1} parent=0
    _
  %s5 = ssub.s32 1, %s3
  %s6 = scalar_select 0, %s5, %s3
  $region1: #{tpu_custom_call.1} parent=0
    #allocation2 [shape = 'u8[2048]{0}', space=vmem, size = 0x800, scoped, tag = 'output window, operand 0']
    #allocation3 [shape = 's32[2]{0}', space=sflag, size = 0x8, scoped, tag = 'scoped memory for tpu_custom_call.1']
    %7 = vsyncpa [#allocation3], 0
    %s8 = scalar_lea.sflag [#allocation3], 1
    %9 = vsyncpa %s8, 0
    loop: start=0, step=1, limit=4
    $region2: #{tpu_custom_call.1} parent=1 // loop_pre_header
      _
    $region3: #{tpu_custom_call.1} parent=1 // loop_header
      %s11 = sphi 0, %s15
      %p12 = scmp.ge.s32.totalorder %s11, 4
      %s21 = sphi 0, %s23
      %s24 = sphi 0, %s21
      %s25 = sphi 0, %s24
      %s41 = sphi 0, %s25
      %s45 = sphi 0, %s45
      %s47 = sphi 0, %s45
      %s48 = sphi 0, %s47
      %s62 = sphi 0, %s48
      %s68 = sphi 0, %s70
      %s71 = sphi 0, %s68
      %s72 = sphi 0, %s71
      %s88 = sphi 0, %s72
    $region4: #{tpu_custom_call.1} parent=1 // loop_header_branch
      %14 = sbr.rel (%p12) target = $region8
    $region5: #{tpu_custom_call.1} parent=1 // loop_body
      %s16 = ssub.s32 %s11, 1
      %s17 = ssub.s32 %s11, 2
      %s18 = sadd.s32 %s11, 1
      %s19 = ssub.s32 %s11, %s18
      %p20 = scmp.eq.s32.totalorder %s19, 0
      %s22 = sadd.s32 %s21, 1
      %s23 = scalar_select %p20, %s21, %s22
      %p26 = pneg %p20
      %p27 = scmp.eq.s32.totalorder %s11, 1
      %p28 = por %p26, %p27
      %p29 = scmp.ne.s32.totalorder %s21, %s24
      %p30 = scmp.eq.s32.totalorder %s11, 0
      %p31 = por %p29, %p30
      %p32 = scmp.ne.s32.totalorder %s21, %s24
      %p33 = scmp.eq.s32.totalorder %s16, 1
      %p34 = por %p32, %p33
      %p35 = scmp.ne.s32.totalorder %s24, %s25
      %p36 = scmp.eq.s32.totalorder %s16, 0
      %p37 = por %p35, %p36
      %p38 = scmp.ne.s32.totalorder %s24, %s25
      %p39 = scmp.eq.s32.totalorder %s17, 1
      %p40 = por %p38, %p39
      %p42 = scmp.ne.s32.totalorder %s25, %s41
      %p43 = scmp.eq.s32.totalorder %s17, 0
      %p44 = por %p42, %p43
      %s46 = sadd.s32 %s45, 1
      %p49 = scmp.eq.s32.totalorder %s11, 1
      %p50 = scmp.ne.s32.totalorder %s45, %s47
      %p51 = scmp.eq.s32.totalorder %s11, 0
      %p52 = por %p50, %p51
      %p53 = scmp.ne.s32.totalorder %s45, %s47
      %p54 = scmp.eq.s32.totalorder %s16, 1
      %p55 = por %p53, %p54
      %p56 = scmp.ne.s32.totalorder %s47, %s48
      %p57 = scmp.eq.s32.totalorder %s16, 0
      %p58 = por %p56, %p57
      %p59 = scmp.ne.s32.totalorder %s47, %s48
      %p60 = scmp.eq.s32.totalorder %s17, 1
      %p61 = por %p59, %p60
      %p63 = scmp.ne.s32.totalorder %s48, %s62
      %p64 = scmp.eq.s32.totalorder %s17, 0
      %p65 = por %p63, %p64
      %s66 = ssub.s32 %s11, %s18
      %p67 = scmp.eq.s32.totalorder %s66, 0
      %s69 = sadd.s32 %s68, 1
      %s70 = scalar_select %p67, %s68, %s69
      %p73 = pneg %p67
      %p74 = scmp.eq.s32.totalorder %s11, 1
      %p75 = por %p73, %p74
      %p76 = scmp.ne.s32.totalorder %s68, %s71
      %p77 = scmp.eq.s32.totalorder %s11, 0
      %p78 = por %p76, %p77
      %p79 = scmp.ne.s32.totalorder %s68, %s71
      %p80 = scmp.eq.s32.totalorder %s16, 1
      %p81 = por %p79, %p80
      %p82 = scmp.ne.s32.totalorder %s71, %s72
      %p83 = scmp.eq.s32.totalorder %s16, 0
      %p84 = por %p82, %p83
      %p85 = scmp.ne.s32.totalorder %s71, %s72
      %p86 = scmp.eq.s32.totalorder %s17, 1
      %p87 = por %p85, %p86
      %p89 = scmp.ne.s32.totalorder %s72, %s88
      %p90 = scmp.eq.s32.totalorder %s17, 0
      %p91 = por %p89, %p90
      %p92 = scmp.le.s32.totalorder 1, %s11
      %p93 = scmp.lt.s32.totalorder %s11, 3
      %p94 = pnand %p92, %p93
      %p95 = pneg %p94
      // Predicated region
      $region9: #{tpu_custom_call.1} parent=5 // pred_check
        _
      $region10: #{tpu_custom_call.1} parent=5 // pred_check_branch
        %97 = sbr.rel (%p94) target = $region12
      $region11: #{tpu_custom_call.1} parent=5 // pred_region
        %s98 = ssub.s32 %s11, 1
        // Predicated region
        $region13: #{tpu_custom_call.1} parent=11 // pred_check
          %p99 = pneg %p58
        $region14: #{tpu_custom_call.1} parent=11 // pred_check_branch
          %101 = sbr.rel (%p99) target = $region16
        $region15: #{tpu_custom_call.1} parent=11 // pred_region
          _
        $region16: #{tpu_custom_call.1} parent=11 // pred_fallthru
          _
      $region12: #{tpu_custom_call.1} parent=5 // pred_fallthru
        _
      %p102 = scmp.lt.s32.totalorder %s11, 2
      // Predicated region
      $region17: #{tpu_custom_call.1} parent=5 // pred_check
        %p103 = pneg %p102
      $region18: #{tpu_custom_call.1} parent=5 // pred_check_branch
        %105 = sbr.rel (%p103) target = $region20
      $region19: #{tpu_custom_call.1} parent=5 // pred_region
        // Predicated region
        $region21: #{tpu_custom_call.1} parent=19 // pred_check
          %p106 = pneg %p31
        $region22: #{tpu_custom_call.1} parent=19 // pred_check_branch
          %108 = sbr.rel (%p106) target = $region24
        $region23: #{tpu_custom_call.1} parent=19 // pred_region
          %p109 = scmp.lt.s32.totalorder %s11, 1
          %s110 = scalar_select %p109, %s11, 1
          %s111 = smul.addr %s110, 32
          %s112 = smul.addr %s111, 4
          %s113 = scalar_lea.vmem %s0, %s112
        $region24: #{tpu_custom_call.1} parent=19 // pred_fallthru
          _
      $region20: #{tpu_custom_call.1} parent=5 // pred_fallthru
        _
      %p114 = scmp.le.s32.totalorder 1, %s11
      %p115 = scmp.lt.s32.totalorder %s11, 3
      %p116 = pnand %p114, %p115
      %p117 = pneg %p116
      // Predicated region
      $region25: #{tpu_custom_call.1} parent=5 // pred_check
        _
      $region26: #{tpu_custom_call.1} parent=5 // pred_check_branch
        %119 = sbr.rel (%p116) target = $region28
      $region27: #{tpu_custom_call.1} parent=5 // pred_region
        %s120 = ssub.s32 %s11, 1
        %p121 = scmp.lt.s32.totalorder %s16, 1
        %s122 = scalar_select %p121, %s16, 1
        %s123 = smul.addr %s122, 32
        %s124 = smul.addr %s123, 4
        %s125 = scalar_lea.vmem %s0, %s124
        %p126 = pneg %p37
        %p127 = pneg %p34
        %p128 = pneg %p58
        %p129 = pneg %p55
        %p130 = pneg %p84
        %p131 = pneg %p81
        %s132 = sand.u32 %s71, 1
        %s133 = scalar_lea.sflag [#allocation3], %s132
        %s134 = sand.u32 %s71, 1
        %s135 = smul.addr %s134, 2
        %s136 = scalar_lea.vmem [#allocation2], %s135
        %p137 = scmp.lt.s32.totalorder %s16, 1
        %s138 = scalar_select %p137, %s16, 1
        %s139 = smul.addr %s138, 32
        %s140 = smul.addr %s139, 4
        %s141 = scalar_lea.vmem %s0, %s140
        %v143 = vld [vmem:[%s141] sm:$0xf]
        %v144 = vld [vmem:[%s141 + $0x4] sm:$0xf]
        %v145 = vld [vmem:[%s141 + $0x8] sm:$0xf]
        %v146 = vld [vmem:[%s141 + $0xc] sm:$0xf]
        %v147 = vld [vmem:[%s141 + $0x10] sm:$0xf]
        %v148 = vld [vmem:[%s141 + $0x14] sm:$0xf]
        %v149 = vld [vmem:[%s141 + $0x18] sm:$0xf]
        %v150 = vld [vmem:[%s141 + $0x1c] sm:$0xf]
        %v151 = vld [vmem:[%s141 + $0x20] sm:$0xf]
        %v152 = vld [vmem:[%s141 + $0x24] sm:$0xf]
        %v153 = vld [vmem:[%s141 + $0x28] sm:$0xf]
        %v154 = vld [vmem:[%s141 + $0x2c] sm:$0xf]
        %v155 = vld [vmem:[%s141 + $0x30] sm:$0xf]
        %v156 = vld [vmem:[%s141 + $0x34] sm:$0xf]
        %v157 = vld [vmem:[%s141 + $0x38] sm:$0xf]
        %v158 = vld [vmem:[%s141 + $0x3c] sm:$0xf]
        %v159 = vld [vmem:[%s141 + $0x40] sm:$0xf]
        %v160 = vld [vmem:[%s141 + $0x44] sm:$0xf]
        %v161 = vld [vmem:[%s141 + $0x48] sm:$0xf]
        %v162 = vld [vmem:[%s141 + $0x4c] sm:$0xf]
        %v163 = vld [vmem:[%s141 + $0x50] sm:$0xf]
        %v164 = vld [vmem:[%s141 + $0x54] sm:$0xf]
        %v165 = vld [vmem:[%s141 + $0x58] sm:$0xf]
        %v166 = vld [vmem:[%s141 + $0x5c] sm:$0xf]
        %v167 = vld [vmem:[%s141 + $0x60] sm:$0xf]
        %v168 = vld [vmem:[%s141 + $0x64] sm:$0xf]
        %v169 = vld [vmem:[%s141 + $0x68] sm:$0xf]
        %v170 = vld [vmem:[%s141 + $0x6c] sm:$0xf]
        %v171 = vld [vmem:[%s141 + $0x70] sm:$0xf]
        %v172 = vld [vmem:[%s141 + $0x74] sm:$0xf]
        %v173 = vld [vmem:[%s141 + $0x78] sm:$0xf]
        %v174 = vld [vmem:[%s141 + $0x7c] sm:$0xf]
        %v175 = vld [vmem:[%s1] sm:$0x3]
        %v208 = vunpack.c.l.b16 %v143
        %v209 = vunpack.c.l.b16 %v144
        %v210 = vunpack.c.l.b16 %v145
        %v211 = vunpack.c.l.b16 %v146
        %v212 = vunpack.c.l.b16 %v147
        %v213 = vunpack.c.l.b16 %v148
        %v214 = vunpack.c.l.b16 %v149
        %v215 = vunpack.c.l.b16 %v150
        %v216 = vunpack.c.l.b16 %v151
        %v217 = vunpack.c.l.b16 %v152
        %v218 = vunpack.c.l.b16 %v153
        %v219 = vunpack.c.l.b16 %v154
        %v220 = vunpack.c.l.b16 %v155
        %v221 = vunpack.c.l.b16 %v156
        %v222 = vunpack.c.l.b16 %v157
        %v223 = vunpack.c.l.b16 %v158
        %v224 = vunpack.c.l.b16 %v159
        %v225 = vunpack.c.l.b16 %v160
        %v226 = vunpack.c.l.b16 %v161
        %v227 = vunpack.c.l.b16 %v162
        %v228 = vunpack.c.l.b16 %v163
        %v229 = vunpack.c.l.b16 %v164
        %v230 = vunpack.c.l.b16 %v165
        %v231 = vunpack.c.l.b16 %v166
        %v232 = vunpack.c.l.b16 %v167
        %v233 = vunpack.c.l.b16 %v168
        %v234 = vunpack.c.l.b16 %v169
        %v235 = vunpack.c.l.b16 %v170
        %v236 = vunpack.c.l.b16 %v171
        %v237 = vunpack.c.l.b16 %v172
        %v238 = vunpack.c.l.b16 %v173
        %v239 = vunpack.c.l.b16 %v174
        %v240 = vpack.c.b16 %v209, %v208
        %v241 = vpack.c.b16 %v211, %v210
        %v242 = vpack.c.b16 %v213, %v212
        %v243 = vpack.c.b16 %v215, %v214
        %v244 = vpack.c.b16 %v217, %v216
        %v245 = vpack.c.b16 %v219, %v218
        %v246 = vpack.c.b16 %v221, %v220
        %v247 = vpack.c.b16 %v223, %v222
        %v248 = vpack.c.b16 %v225, %v224
        %v249 = vpack.c.b16 %v227, %v226
        %v250 = vpack.c.b16 %v229, %v228
        %v251 = vpack.c.b16 %v231, %v230
        %v252 = vpack.c.b16 %v233, %v232
        %v253 = vpack.c.b16 %v235, %v234
        %v254 = vpack.c.b16 %v237, %v236
        %v255 = vpack.c.b16 %v239, %v238
        %vm256 = vcmask 31744
        %v258 = vsel %vm256, %v240, 0
        %v261 = vsel %vm256, %v241, 0
        %v264 = vsel %vm256, %v242, 0
        %v267 = vsel %vm256, %v243, 0
        %v270 = vsel %vm256, %v244, 0
        %v273 = vsel %vm256, %v245, 0
        %v276 = vsel %vm256, %v246, 0
        %v279 = vsel %vm256, %v247, 0
        %v282 = vsel %vm256, %v248, 0
        %v285 = vsel %vm256, %v249, 0
        %v288 = vsel %vm256, %v250, 0
        %v291 = vsel %vm256, %v251, 0
        %v294 = vsel %vm256, %v252, 0
        %v297 = vsel %vm256, %v253, 0
        %v300 = vsel %vm256, %v254, 0
        %v303 = vsel %vm256, %v255, 0
        %vm305 = vcmask 1041408
        %v307 = vsel %vm305, %v175, 0
        %309 = vmatpush.bf16.msra.mxu0 0
        %310 = vmatpush.bf16.msra.mxu0 0
        %311 = vmatpush.bf16.msra.mxu0 0
        %312 = vmatpush.bf16.msra.mxu0 0
        %313 = vmatpush.bf16.msra.mxu0 0
        %314 = vmatpush.bf16.msra.mxu0 0
        %315 = vmatpush.bf16.msra.mxu0 0
        %316 = vmatpush.bf16.msra.mxu0 %v307
        %317 = vmatmul.bf16.gmra.mxu0 %v258
        %v318 = vpop.f32.mrf.mxu0
        %v319 = vadd.f32 0.0, %v318
        %v320 = vpop.f32.mrf.mxu0
        %v321 = vadd.f32 0.0, %v320
        %322 = vmatmul.bf16.gmra.mxu0 %v261
        %v323 = vpop.f32.mrf.mxu0
        %v324 = vadd.f32 0.0, %v323
        %v325 = vpop.f32.mrf.mxu0
        %v326 = vadd.f32 0.0, %v325
        %327 = vmatmul.bf16.gmra.mxu0 %v264
        %v328 = vpop.f32.mrf.mxu0
        %v329 = vadd.f32 0.0, %v328
        %v330 = vpop.f32.mrf.mxu0
        %v331 = vadd.f32 0.0, %v330
        %332 = vmatmul.bf16.gmra.mxu0 %v267
        %v333 = vpop.f32.mrf.mxu0
        %v334 = vadd.f32 0.0, %v333
        %v335 = vpop.f32.mrf.mxu0
        %v336 = vadd.f32 0.0, %v335
        %337 = vmatmul.bf16.gmra.mxu0 %v270
        %v338 = vpop.f32.mrf.mxu0
        %v339 = vadd.f32 0.0, %v338
        %v340 = vpop.f32.mrf.mxu0
        %v341 = vadd.f32 0.0, %v340
        %342 = vmatmul.bf16.gmra.mxu0 %v273
        %v343 = vpop.f32.mrf.mxu0
        %v344 = vadd.f32 0.0, %v343
        %v345 = vpop.f32.mrf.mxu0
        %v346 = vadd.f32 0.0, %v345
        %347 = vmatmul.bf16.gmra.mxu0 %v276
        %v348 = vpop.f32.mrf.mxu0
        %v349 = vadd.f32 0.0, %v348
        %v350 = vpop.f32.mrf.mxu0
        %v351 = vadd.f32 0.0, %v350
        %352 = vmatmul.bf16.gmra.mxu0 %v279
        %v353 = vpop.f32.mrf.mxu0
        %v354 = vadd.f32 0.0, %v353
        %v355 = vpop.f32.mrf.mxu0
        %v356 = vadd.f32 0.0, %v355
        %357 = vmatmul.bf16.gmra.mxu0 %v282
        %v358 = vpop.f32.mrf.mxu0
        %v359 = vadd.f32 0.0, %v358
        %v360 = vpop.f32.mrf.mxu0
        %v361 = vadd.f32 0.0, %v360
        %362 = vmatmul.bf16.gmra.mxu0 %v285
        %v363 = vpop.f32.mrf.mxu0
        %v364 = vadd.f32 0.0, %v363
        %v365 = vpop.f32.mrf.mxu0
        %v366 = vadd.f32 0.0, %v365
        %367 = vmatmul.bf16.gmra.mxu0 %v288
        %v368 = vpop.f32.mrf.mxu0
        %v369 = vadd.f32 0.0, %v368
        %v370 = vpop.f32.mrf.mxu0
        %v371 = vadd.f32 0.0, %v370
        %372 = vmatmul.bf16.gmra.mxu0 %v291
        %v373 = vpop.f32.mrf.mxu0
        %v374 = vadd.f32 0.0, %v373
        %v375 = vpop.f32.mrf.mxu0
        %v376 = vadd.f32 0.0, %v375
        %377 = vmatmul.bf16.gmra.mxu0 %v294
        %v378 = vpop.f32.mrf.mxu0
        %v379 = vadd.f32 0.0, %v378
        %v380 = vpop.f32.mrf.mxu0
        %v381 = vadd.f32 0.0, %v380
        %382 = vmatmul.bf16.gmra.mxu0 %v297
        %v383 = vpop.f32.mrf.mxu0
        %v384 = vadd.f32 0.0, %v383
        %v385 = vpop.f32.mrf.mxu0
        %v386 = vadd.f32 0.0, %v385
        %387 = vmatmul.bf16.gmra.mxu0 %v300
        %v388 = vpop.f32.mrf.mxu0
        %v389 = vadd.f32 0.0, %v388
        %v390 = vpop.f32.mrf.mxu0
        %v391 = vadd.f32 0.0, %v390
        %392 = vmatmul.bf16.gmra.mxu0 %v303
        %v393 = vpop.f32.mrf.mxu0
        %v394 = vadd.f32 0.0, %v393
        %v395 = vpop.f32.mrf.mxu0
        %v396 = vadd.f32 0.0, %v395
        %397 = vdwg.mxu0
        %vm398 = vcmask 64512
        %v399 = vsel %vm398, %v319, 0.0
        %v400 = vsel %vm398, %v321, 0.0
        %v401 = vadd.f32 %v399, %v400
        %v402 = vsel %vm398, %v324, 0.0
        %v403 = vadd.f32 %v401, %v402
        %v404 = vsel %vm398, %v326, 0.0
        %v405 = vadd.f32 %v403, %v404
        %v406 = vsel %vm398, %v329, 0.0
        %v407 = vadd.f32 %v405, %v406
        %v408 = vsel %vm398, %v331, 0.0
        %v409 = vadd.f32 %v407, %v408
        %v410 = vsel %vm398, %v334, 0.0
        %v411 = vadd.f32 %v409, %v410
        %v412 = vsel %vm398, %v336, 0.0
        %v413 = vadd.f32 %v411, %v412
        %v414 = vsel %vm398, %v339, 0.0
        %v415 = vadd.f32 %v413, %v414
        %v416 = vsel %vm398, %v341, 0.0
        %v417 = vadd.f32 %v415, %v416
        %v418 = vsel %vm398, %v344, 0.0
        %v419 = vadd.f32 %v417, %v418
        %v420 = vsel %vm398, %v346, 0.0
        %v421 = vadd.f32 %v419, %v420
        %v422 = vsel %vm398, %v349, 0.0
        %v423 = vadd.f32 %v421, %v422
        %v424 = vsel %vm398, %v351, 0.0
        %v425 = vadd.f32 %v423, %v424
        %v426 = vsel %vm398, %v354, 0.0
        %v427 = vadd.f32 %v425, %v426
        %v428 = vsel %vm398, %v356, 0.0
        %v429 = vadd.f32 %v427, %v428
        %v430 = vsel %vm398, %v359, 0.0
        %v431 = vadd.f32 %v429, %v430
        %v432 = vsel %vm398, %v361, 0.0
        %v433 = vadd.f32 %v431, %v432
        %v434 = vsel %vm398, %v364, 0.0
        %v435 = vadd.f32 %v433, %v434
        %v436 = vsel %vm398, %v366, 0.0
        %v437 = vadd.f32 %v435, %v436
        %v438 = vsel %vm398, %v369, 0.0
        %v439 = vadd.f32 %v437, %v438
        %v440 = vsel %vm398, %v371, 0.0
        %v441 = vadd.f32 %v439, %v440
        %v442 = vsel %vm398, %v374, 0.0
        %v443 = vadd.f32 %v441, %v442
        %v444 = vsel %vm398, %v376, 0.0
        %v445 = vadd.f32 %v443, %v444
        %v446 = vsel %vm398, %v379, 0.0
        %v447 = vadd.f32 %v445, %v446
        %v448 = vsel %vm398, %v381, 0.0
        %v449 = vadd.f32 %v447, %v448
        %v450 = vsel %vm398, %v384, 0.0
        %v451 = vadd.f32 %v449, %v450
        %v452 = vsel %vm398, %v386, 0.0
        %v453 = vadd.f32 %v451, %v452
        %v454 = vsel %vm398, %v389, 0.0
        %v455 = vadd.f32 %v453, %v454
        %v456 = vsel %vm398, %v391, 0.0
        %v457 = vadd.f32 %v455, %v456
        %v458 = vsel %vm398, %v394, 0.0
        %v459 = vadd.f32 %v457, %v458
        %v460 = vsel %vm398, %v396, 0.0
        %v461 = vadd.f32 %v459, %v460
        %v462 = vrot.slane %v461, 4
        %v463 = vadd.f32 %v461, %v462
        %v464 = vrot.slane %v463, 2
        %v465 = vadd.f32 %v463, %v464
        %v466 = vrot.slane %v465, 1
        %v467 = vadd.f32 %v465, %v466
        %vm468 = vcmask 57344
        %469 = vst.msk [vmem:[%s136] sm:$0x1] %vm468, %v467
        %v470 = vmul.f32 %v319, %v319
        %v471 = vmul.f32 %v321, %v321
        %v472 = vmul.f32 %v324, %v324
        %v473 = vmul.f32 %v326, %v326
        %v474 = vmul.f32 %v329, %v329
        %v475 = vmul.f32 %v331, %v331
        %v476 = vmul.f32 %v334, %v334
        %v477 = vmul.f32 %v336, %v336
        %v478 = vmul.f32 %v339, %v339
        %v479 = vmul.f32 %v341, %v341
        %v480 = vmul.f32 %v344, %v344
        %v481 = vmul.f32 %v346, %v346
        %v482 = vmul.f32 %v349, %v349
        %v483 = vmul.f32 %v351, %v351
        %v484 = vmul.f32 %v354, %v354
        %v485 = vmul.f32 %v356, %v356
        %v486 = vmul.f32 %v359, %v359
        %v487 = vmul.f32 %v361, %v361
        %v488 = vmul.f32 %v364, %v364
        %v489 = vmul.f32 %v366, %v366
        %v490 = vmul.f32 %v369, %v369
        %v491 = vmul.f32 %v371, %v371
        %v492 = vmul.f32 %v374, %v374
        %v493 = vmul.f32 %v376, %v376
        %v494 = vmul.f32 %v379, %v379
        %v495 = vmul.f32 %v381, %v381
        %v496 = vmul.f32 %v384, %v384
        %v497 = vmul.f32 %v386, %v386
        %v498 = vmul.f32 %v389, %v389
        %v499 = vmul.f32 %v391, %v391
        %v500 = vmul.f32 %v394, %v394
        %v501 = vmul.f32 %v396, %v396
        %v502 = vsel %vm398, %v470, 0.0
        %v503 = vsel %vm398, %v471, 0.0
        %v504 = vadd.f32 %v502, %v503
        %v505 = vsel %vm398, %v472, 0.0
        %v506 = vadd.f32 %v504, %v505
        %v507 = vsel %vm398, %v473, 0.0
        %v508 = vadd.f32 %v506, %v507
        %v509 = vsel %vm398, %v474, 0.0
        %v510 = vadd.f32 %v508, %v509
        %v511 = vsel %vm398, %v475, 0.0
        %v512 = vadd.f32 %v510, %v511
        %v513 = vsel %vm398, %v476, 0.0
        %v514 = vadd.f32 %v512, %v513
        %v515 = vsel %vm398, %v477, 0.0
        %v516 = vadd.f32 %v514, %v515
        %v517 = vsel %vm398, %v478, 0.0
        %v518 = vadd.f32 %v516, %v517
        %v519 = vsel %vm398, %v479, 0.0
        %v520 = vadd.f32 %v518, %v519
        %v521 = vsel %vm398, %v480, 0.0
        %v522 = vadd.f32 %v520, %v521
        %v523 = vsel %vm398, %v481, 0.0
        %v524 = vadd.f32 %v522, %v523
        %v525 = vsel %vm398, %v482, 0.0
        %v526 = vadd.f32 %v524, %v525
        %v527 = vsel %vm398, %v483, 0.0
        %v528 = vadd.f32 %v526, %v527
        %v529 = vsel %vm398, %v484, 0.0
        %v530 = vadd.f32 %v528, %v529
        %v531 = vsel %vm398, %v485, 0.0
        %v532 = vadd.f32 %v530, %v531
        %v533 = vsel %vm398, %v486, 0.0
        %v534 = vadd.f32 %v532, %v533
        %v535 = vsel %vm398, %v487, 0.0
        %v536 = vadd.f32 %v534, %v535
        %v537 = vsel %vm398, %v488, 0.0
        %v538 = vadd.f32 %v536, %v537
        %v539 = vsel %vm398, %v489, 0.0
        %v540 = vadd.f32 %v538, %v539
        %v541 = vsel %vm398, %v490, 0.0
        %v542 = vadd.f32 %v540, %v541
        %v543 = vsel %vm398, %v491, 0.0
        %v544 = vadd.f32 %v542, %v543
        %v545 = vsel %vm398, %v492, 0.0
        %v546 = vadd.f32 %v544, %v545
        %v547 = vsel %vm398, %v493, 0.0
        %v548 = vadd.f32 %v546, %v547
        %v549 = vsel %vm398, %v494, 0.0
        %v550 = vadd.f32 %v548, %v549
        %v551 = vsel %vm398, %v495, 0.0
        %v552 = vadd.f32 %v550, %v551
        %v553 = vsel %vm398, %v496, 0.0
        %v554 = vadd.f32 %v552, %v553
        %v555 = vsel %vm398, %v497, 0.0
        %v556 = vadd.f32 %v554, %v555
        %v557 = vsel %vm398, %v498, 0.0
        %v558 = vadd.f32 %v556, %v557
        %v559 = vsel %vm398, %v499, 0.0
        %v560 = vadd.f32 %v558, %v559
        %v561 = vsel %vm398, %v500, 0.0
        %v562 = vadd.f32 %v560, %v561
        %v563 = vsel %vm398, %v501, 0.0
        %v564 = vadd.f32 %v562, %v563
        %v565 = vrot.slane %v564, 4
        %v566 = vadd.f32 %v564, %v565
        %v567 = vrot.slane %v566, 2
        %v568 = vadd.f32 %v566, %v567
        %v569 = vrot.slane %v568, 1
        %v570 = vadd.f32 %v568, %v569
        %571 = vst.msk [vmem:[%s136 + $0x1] sm:$0x1] %vm468, %v570
        %s572 = sand.u32 %s71, 1
        %s573 = scalar_lea.sflag [#allocation3], %s572
        %s574 = sand.u32 %s71, 1
        %s575 = smul.addr %s574, 2
        %s576 = scalar_lea.vmem [#allocation2], %s575
        // Predicated region
        $region29: #{tpu_custom_call.1} parent=27 // pred_check
          %p577 = pneg %p81
        $region30: #{tpu_custom_call.1} parent=27 // pred_check_branch
          %579 = sbr.rel (%p577) target = $region32
        $region31: #{tpu_custom_call.1} parent=27 // pred_region
          %581 = vsyncadd %s573, 0
          %s582 = smul.addr %s16, 2
          %s583 = scalar_lea.hbm %s2, %s582
          %s585 = sshll.u32 %s576, 4
          %s586 = int_to_ptr.vmem [resolvable:$true] %s585
          %s587 = sshll.u32 %s583, 4
          %s588 = int_to_ptr.hbm [resolvable:$true] %s587
          %590 = dma.vmem_to_hbm [thread:$0]  %s586, 32, %s588, %s573
        $region32: #{tpu_custom_call.1} parent=27 // pred_fallthru
          _
      $region28: #{tpu_custom_call.1} parent=5 // pred_fallthru
        _
      %p591 = scmp.le.s32.totalorder 2, %s11
      // Predicated region
      $region33: #{tpu_custom_call.1} parent=5 // pred_check
        %p592 = pneg %p591
      $region34: #{tpu_custom_call.1} parent=5 // pred_check_branch
        %594 = sbr.rel (%p592) target = $region36
      $region35: #{tpu_custom_call.1} parent=5 // pred_region
        %s595 = ssub.s32 %s11, 2
        // Predicated region
        $region37: #{tpu_custom_call.1} parent=35 // pred_check
          %p596 = pneg %p87
        $region38: #{tpu_custom_call.1} parent=35 // pred_check_branch
          %598 = sbr.rel (%p596) target = $region40
        $region39: #{tpu_custom_call.1} parent=35 // pred_region
          %s599 = sand.u32 %s72, 1
          %s600 = scalar_lea.sflag [#allocation3], %s599
          %s601 = sand.u32 %s72, 1
          %s602 = smul.addr %s601, 2
          %s603 = scalar_lea.vmem [#allocation2], %s602
          %605 = dma.done %s600, 32
        $region40: #{tpu_custom_call.1} parent=35 // pred_fallthru
          _
      $region36: #{tpu_custom_call.1} parent=5 // pred_fallthru
        _
    $region6: #{tpu_custom_call.1} parent=1 // loop_footer
      %s15 = sadd.s32 1, %s11
    $region7: #{tpu_custom_call.1} parent=1 // loop_footer_branch
      %10 = sbr.rel target = $region3
    $region8: #{tpu_custom_call.1} parent=1 // loop_exit
      _
    %606 = vsyncpa [#allocation3], 1
    %s607 = scalar_lea.sflag [#allocation3], 1
    %608 = vsyncpa %s607, 1

</llo_original>
